<compile_context>
chip_gen: v7x
topology: tpu7x:2x2x1
jax: 0.10.0
libtpu: 0.0.40
codegen_flags: <defaults>
</compile_context>

<pallas_src>
import jax
import jax.numpy as jnp
from jax.experimental import pallas as pl
from jax.experimental.pallas import tpu as pltpu


def lstm_forward(x, w_ih, w_hh, b_ih, b_hh, w_fc, b_fc):
    """x: (B, T, I) batch-first (PyTorch convention).

    w_ih: (4H, I), w_hh: (4H, H), b_ih/b_hh: (4H,)
    w_fc: (C, H), b_fc: (C,)
    Returns: (B, C) == fc(h_T)  (matches the PyTorch module's forward).
    """
    B, T, I = x.shape
    H4, _ = w_ih.shape
    H = H4 // 4
    C = w_fc.shape[0]

    # Layout prep (free XLA ops in the wrapper):
    #  - time-major, flattened to (T*B, I) so the input projection for ALL
    #    time steps is one big MXU matmul inside the kernel,
    #  - weights pre-transposed to (in_dim, out_dim) so matmuls are `x @ W`,
    #  - the two LSTM biases fused into one row vector.
    x_flat = jnp.transpose(x, (1, 0, 2)).reshape(T * B, I).astype(jnp.float32)
    wih_t = jnp.transpose(w_ih).astype(jnp.float32)            # (I, 4H)
    whh_t = jnp.transpose(w_hh).astype(jnp.float32)            # (H, 4H)
    b = (b_ih + b_hh).reshape(1, 4 * H).astype(jnp.float32)    # (1, 4H)
    wfc_t = jnp.transpose(w_fc).astype(jnp.float32)            # (H, C)
    bfc = b_fc.reshape(1, C).astype(jnp.float32)               # (1, C)

    def lstm_kernel(x_ref, wih_ref, whh_ref, b_ref, wfc_ref, bfc_ref, out_ref):
        # ---- hoisted input projection: all T time steps in one MXU matmul ----
        gates_x = (jnp.dot(x_ref[...], wih_ref[...],
                           preferred_element_type=jnp.float32)
                   + b_ref[...])                               # (T*B, 4H)

        whh = whh_ref[...]                                     # load once
        h = jnp.zeros((B, H), jnp.float32)
        c = jnp.zeros((B, H), jnp.float32)

        # ---- recurrence: fully unrolled, single matmul per step ----
        for t in range(T):
            gates = (gates_x[t * B:(t + 1) * B, :]
                     + jnp.dot(h, whh, preferred_element_type=jnp.float32))
            # full (B, 4H)=(B,128) lane-aligned activations, then slice
            s = jax.nn.sigmoid(gates)      # i, f, o gates (one EUP pass)
            g = jnp.tanh(gates)            # only the g slice is used
            i_g = s[:, 0 * H:1 * H]
            f_g = s[:, 1 * H:2 * H]
            g_g = g[:, 2 * H:3 * H]
            o_g = s[:, 3 * H:4 * H]
            c = f_g * c + i_g * g_g
            h = o_g * jnp.tanh(c)

        # ---- final Linear on the last hidden state ----
        out = (jnp.dot(h, wfc_ref[...], preferred_element_type=jnp.float32)
               + bfc_ref[...])
        out_ref[...] = out.astype(out_ref.dtype)

    vmem_spec = pl.BlockSpec(memory_space=pltpu.MemorySpace.VMEM)
    out = pl.pallas_call(
        lstm_kernel,
        out_shape=jax.ShapeDtypeStruct((B, C), jnp.float32),
        in_specs=[vmem_spec] * 6,
        out_specs=vmem_spec,
    )(x_flat, wih_t, whh_t, b, wfc_t, bfc)
    return out


def reference_lstm(x, w_ih, w_hh, b_ih, b_hh, w_fc, b_fc):
    """Pure-JAX reference matching torch.nn.LSTM + Linear forward."""
    B, T, I = x.shape
    H = w_hh.shape[1]
    h = jnp.zeros((B, H), jnp.float32)
    c = jnp.zeros((B, H), jnp.float32)
    for t in range(T):
        gates = x[:, t, :] @ w_ih.T + b_ih + h @ w_hh.T + b_hh
        i_g = jax.nn.sigmoid(gates[:, 0 * H:1 * H])
        f_g = jax.nn.sigmoid(gates[:, 1 * H:2 * H])
        g_g = jnp.tanh(gates[:, 2 * H:3 * H])
        o_g = jax.nn.sigmoid(gates[:, 3 * H:4 * H])
        c = f_g * c + i_g * g_g
        h = o_g * jnp.tanh(c)
    return h @ w_fc.T + b_fc


if __name__ == "__main__":
    # module config: input_size=32, num_classes=32, num_layers=1, hidden=32
    B, T = 2, 8
    I, H, C = 32, 32, 32

    key = jax.random.PRNGKey(0)
    ks = jax.random.split(key, 8)
    # deterministic init mimicking PyTorch's U(-1/sqrt(H), 1/sqrt(H))
    s = 1.0 / jnp.sqrt(jnp.float32(H))
    w_ih = jax.random.uniform(ks[0], (4 * H, I), jnp.float32, -s, s)
    w_hh = jax.random.uniform(ks[1], (4 * H, H), jnp.float32, -s, s)
    b_ih = jax.random.uniform(ks[2], (4 * H,), jnp.float32, -s, s)
    b_hh = jax.random.uniform(ks[3], (4 * H,), jnp.float32, -s, s)
    w_fc = jax.random.uniform(ks[4], (C, H), jnp.float32, -s, s)
    b_fc = jax.random.uniform(ks[5], (C,), jnp.float32, -s, s)

    x = jax.random.normal(ks[6], (B, T, I), jnp.float32)

    out = lstm_forward(x, w_ih, w_hh, b_ih, b_hh, w_fc, b_fc)
    out = jax.block_until_ready(out)

    ref = reference_lstm(x, w_ih, w_hh, b_ih, b_hh, w_fc, b_fc)
    assert out.shape == (B, C)
    assert jnp.allclose(out, ref, atol=1e-5, rtol=1e-5), "mismatch vs reference"

    print("KERNEL_OK")
</pallas_src>

<mosaic_0001>
module attributes {stable_mosaic.version = 11 : i64} {
  func.func @lstm_kernel(%arg0: memref<16x32xf32, #tpu.memory_space<vmem>>, %arg1: memref<32x128xf32, #tpu.memory_space<vmem>>, %arg2: memref<32x128xf32, #tpu.memory_space<vmem>>, %arg3: memref<1x128xf32, #tpu.memory_space<vmem>>, %arg4: memref<32x32xf32, #tpu.memory_space<vmem>>, %arg5: memref<1x32xf32, #tpu.memory_space<vmem>>, %arg6: memref<2x32xf32, #tpu.memory_space<vmem>>) attributes {dimension_semantics = [], scalar_prefetch = 0 : i64, scratch_operands = 0 : i64, tpu.core_type = #tpu.core_type<tc>} {
    %c0 = arith.constant 0 : index
    %c0_0 = arith.constant 0 : index
    %0 = vector.load %arg0[%c0, %c0_0] : memref<16x32xf32, #tpu.memory_space<vmem>>, vector<16x32xf32>
    %c0_1 = arith.constant 0 : index
    %c0_2 = arith.constant 0 : index
    %1 = vector.load %arg1[%c0_1, %c0_2] : memref<32x128xf32, #tpu.memory_space<vmem>>, vector<32x128xf32>
    %cst = arith.constant dense<0.000000e+00> : vector<16x128xf32>
    %2 = tpu.matmul %0, %1, %cst {dimension_numbers = #tpu.dot_dimension_numbers<[1], [0], [0], [1], [0, 0, 1, 1], [], []>} : vector<16x32xf32>, vector<32x128xf32>, vector<16x128xf32> -> vector<16x128xf32>
    %c0_3 = arith.constant 0 : index
    %c0_4 = arith.constant 0 : index
    %3 = vector.load %arg3[%c0_3, %c0_4] : memref<1x128xf32, #tpu.memory_space<vmem>>, vector<1x128xf32>
    %4 = vector.broadcast %3 : vector<1x128xf32> to vector<16x128xf32>
    %5 = arith.addf %2, %4 : vector<16x128xf32>
    %c0_5 = arith.constant 0 : index
    %c0_6 = arith.constant 0 : index
    %6 = vector.load %arg2[%c0_5, %c0_6] : memref<32x128xf32, #tpu.memory_space<vmem>>, vector<32x128xf32>
    %cst_7 = arith.constant 0.000000e+00 : f32
    %7 = vector.broadcast %cst_7 : f32 to vector<2x32xf32>
    %cst_8 = arith.constant 0.000000e+00 : f32
    %8 = vector.broadcast %cst_8 : f32 to vector<2x32xf32>
    %9 = vector.extract_strided_slice %5 {offsets = [0, 0], sizes = [2, 128], strides = [1, 1]} : vector<16x128xf32> to vector<2x128xf32>
    %cst_9 = arith.constant dense<0.000000e+00> : vector<2x128xf32>
    %10 = tpu.matmul %7, %6, %cst_9 {dimension_numbers = #tpu.dot_dimension_numbers<[1], [0], [0], [1], [0, 0, 1, 1], [], []>} : vector<2x32xf32>, vector<32x128xf32>, vector<2x128xf32> -> vector<2x128xf32>
    %11 = arith.addf %9, %10 : vector<2x128xf32>
    %12 = arith.negf %11 : vector<2x128xf32>
    %13 = math.exp %12 : vector<2x128xf32>
    %cst_10 = arith.constant 1.000000e+00 : f32
    %14 = vector.broadcast %cst_10 : f32 to vector<2x128xf32>
    %15 = arith.addf %14, %13 : vector<2x128xf32>
    %16 = arith.divf %14, %15 : vector<2x128xf32>
    %17 = math.tanh %11 : vector<2x128xf32>
    %18 = vector.extract_strided_slice %16 {offsets = [0, 0], sizes = [2, 32], strides = [1, 1]} : vector<2x128xf32> to vector<2x32xf32>
    %19 = vector.extract_strided_slice %16 {offsets = [0, 32], sizes = [2, 32], strides = [1, 1]} : vector<2x128xf32> to vector<2x32xf32>
    %20 = vector.extract_strided_slice %17 {offsets = [0, 64], sizes = [2, 32], strides = [1, 1]} : vector<2x128xf32> to vector<2x32xf32>
    %21 = vector.extract_strided_slice %16 {offsets = [0, 96], sizes = [2, 32], strides = [1, 1]} : vector<2x128xf32> to vector<2x32xf32>
    %22 = arith.mulf %19, %8 : vector<2x32xf32>
    %23 = arith.mulf %18, %20 : vector<2x32xf32>
    %24 = arith.addf %22, %23 : vector<2x32xf32>
    %25 = math.tanh %24 : vector<2x32xf32>
    %26 = arith.mulf %21, %25 : vector<2x32xf32>
    %27 = vector.extract_strided_slice %5 {offsets = [2, 0], sizes = [2, 128], strides = [1, 1]} : vector<16x128xf32> to vector<2x128xf32>
    %cst_11 = arith.constant dense<0.000000e+00> : vector<2x128xf32>
    %28 = tpu.matmul %26, %6, %cst_11 {dimension_numbers = #tpu.dot_dimension_numbers<[1], [0], [0], [1], [0, 0, 1, 1], [], []>} : vector<2x32xf32>, vector<32x128xf32>, vector<2x128xf32> -> vector<2x128xf32>
    %29 = arith.addf %27, %28 : vector<2x128xf32>
    %30 = arith.negf %29 : vector<2x128xf32>
    %31 = math.exp %30 : vector<2x128xf32>
    %cst_12 = arith.constant 1.000000e+00 : f32
    %32 = vector.broadcast %cst_12 : f32 to vector<2x128xf32>
    %33 = arith.addf %32, %31 : vector<2x128xf32>
    %34 = arith.divf %32, %33 : vector<2x128xf32>
    %35 = math.tanh %29 : vector<2x128xf32>
    %36 = vector.extract_strided_slice %34 {offsets = [0, 0], sizes = [2, 32], strides = [1, 1]} : vector<2x128xf32> to vector<2x32xf32>
    %37 = vector.extract_strided_slice %34 {offsets = [0, 32], sizes = [2, 32], strides = [1, 1]} : vector<2x128xf32> to vector<2x32xf32>
    %38 = vector.extract_strided_slice %35 {offsets = [0, 64], sizes = [2, 32], strides = [1, 1]} : vector<2x128xf32> to vector<2x32xf32>
    %39 = vector.extract_strided_slice %34 {offsets = [0, 96], sizes = [2, 32], strides = [1, 1]} : vector<2x128xf32> to vector<2x32xf32>
    %40 = arith.mulf %37, %24 : vector<2x32xf32>
    %41 = arith.mulf %36, %38 : vector<2x32xf32>
    %42 = arith.addf %40, %41 : vector<2x32xf32>
    %43 = math.tanh %42 : vector<2x32xf32>
    %44 = arith.mulf %39, %43 : vector<2x32xf32>
    %45 = vector.extract_strided_slice %5 {offsets = [4, 0], sizes = [2, 128], strides = [1, 1]} : vector<16x128xf32> to vector<2x128xf32>
    %cst_13 = arith.constant dense<0.000000e+00> : vector<2x128xf32>
    %46 = tpu.matmul %44, %6, %cst_13 {dimension_numbers = #tpu.dot_dimension_numbers<[1], [0], [0], [1], [0, 0, 1, 1], [], []>} : vector<2x32xf32>, vector<32x128xf32>, vector<2x128xf32> -> vector<2x128xf32>
    %47 = arith.addf %45, %46 : vector<2x128xf32>
    %48 = arith.negf %47 : vector<2x128xf32>
    %49 = math.exp %48 : vector<2x128xf32>
    %cst_14 = arith.constant 1.000000e+00 : f32
    %50 = vector.broadcast %cst_14 : f32 to vector<2x128xf32>
    %51 = arith.addf %50, %49 : vector<2x128xf32>
    %52 = arith.divf %50, %51 : vector<2x128xf32>
    %53 = math.tanh %47 : vector<2x128xf32>
    %54 = vector.extract_strided_slice %52 {offsets = [0, 0], sizes = [2, 32], strides = [1, 1]} : vector<2x128xf32> to vector<2x32xf32>
    %55 = vector.extract_strided_slice %52 {offsets = [0, 32], sizes = [2, 32], strides = [1, 1]} : vector<2x128xf32> to vector<2x32xf32>
    %56 = vector.extract_strided_slice %53 {offsets = [0, 64], sizes = [2, 32], strides = [1, 1]} : vector<2x128xf32> to vector<2x32xf32>
    %57 = vector.extract_strided_slice %52 {offsets = [0, 96], sizes = [2, 32], strides = [1, 1]} : vector<2x128xf32> to vector<2x32xf32>
    %58 = arith.mulf %55, %42 : vector<2x32xf32>
    %59 = arith.mulf %54, %56 : vector<2x32xf32>
    %60 = arith.addf %58, %59 : vector<2x32xf32>
    %61 = math.tanh %60 : vector<2x32xf32>
    %62 = arith.mulf %57, %61 : vector<2x32xf32>
    %63 = vector.extract_strided_slice %5 {offsets = [6, 0], sizes = [2, 128], strides = [1, 1]} : vector<16x128xf32> to vector<2x128xf32>
    %cst_15 = arith.constant dense<0.000000e+00> : vector<2x128xf32>
    %64 = tpu.matmul %62, %6, %cst_15 {dimension_numbers = #tpu.dot_dimension_numbers<[1], [0], [0], [1], [0, 0, 1, 1], [], []>} : vector<2x32xf32>, vector<32x128xf32>, vector<2x128xf32> -> vector<2x128xf32>
    %65 = arith.addf %63, %64 : vector<2x128xf32>
    %66 = arith.negf %65 : vector<2x128xf32>
    %67 = math.exp %66 : vector<2x128xf32>
    %cst_16 = arith.constant 1.000000e+00 : f32
    %68 = vector.broadcast %cst_16 : f32 to vector<2x128xf32>
    %69 = arith.addf %68, %67 : vector<2x128xf32>
    %70 = arith.divf %68, %69 : vector<2x128xf32>
    %71 = math.tanh %65 : vector<2x128xf32>
    %72 = vector.extract_strided_slice %70 {offsets = [0, 0], sizes = [2, 32], strides = [1, 1]} : vector<2x128xf32> to vector<2x32xf32>
    %73 = vector.extract_strided_slice %70 {offsets = [0, 32], sizes = [2, 32], strides = [1, 1]} : vector<2x128xf32> to vector<2x32xf32>
    %74 = vector.extract_strided_slice %71 {offsets = [0, 64], sizes = [2, 32], strides = [1, 1]} : vector<2x128xf32> to vector<2x32xf32>
    %75 = vector.extract_strided_slice %70 {offsets = [0, 96], sizes = [2, 32], strides = [1, 1]} : vector<2x128xf32> to vector<2x32xf32>
    %76 = arith.mulf %73, %60 : vector<2x32xf32>
    %77 = arith.mulf %72, %74 : vector<2x32xf32>
    %78 = arith.addf %76, %77 : vector<2x32xf32>
    %79 = math.tanh %78 : vector<2x32xf32>
    %80 = arith.mulf %75, %79 : vector<2x32xf32>
    %81 = vector.extract_strided_slice %5 {offsets = [8, 0], sizes = [2, 128], strides = [1, 1]} : vector<16x128xf32> to vector<2x128xf32>
    %cst_17 = arith.constant dense<0.000000e+00> : vector<2x128xf32>
    %82 = tpu.matmul %80, %6, %cst_17 {dimension_numbers = #tpu.dot_dimension_numbers<[1], [0], [0], [1], [0, 0, 1, 1], [], []>} : vector<2x32xf32>, vector<32x128xf32>, vector<2x128xf32> -> vector<2x128xf32>
    %83 = arith.addf %81, %82 : vector<2x128xf32>
    %84 = arith.negf %83 : vector<2x128xf32>
    %85 = math.exp %84 : vector<2x128xf32>
    %cst_18 = arith.constant 1.000000e+00 : f32
    %86 = vector.broadcast %cst_18 : f32 to vector<2x128xf32>
    %87 = arith.addf %86, %85 : vector<2x128xf32>
    %88 = arith.divf %86, %87 : vector<2x128xf32>
    %89 = math.tanh %83 : vector<2x128xf32>
    %90 = vector.extract_strided_slice %88 {offsets = [0, 0], sizes = [2, 32], strides = [1, 1]} : vector<2x128xf32> to vector<2x32xf32>
    %91 = vector.extract_strided_slice %88 {offsets = [0, 32], sizes = [2, 32], strides = [1, 1]} : vector<2x128xf32> to vector<2x32xf32>
    %92 = vector.extract_strided_slice %89 {offsets = [0, 64], sizes = [2, 32], strides = [1, 1]} : vector<2x128xf32> to vector<2x32xf32>
    %93 = vector.extract_strided_slice %88 {offsets = [0, 96], sizes = [2, 32], strides = [1, 1]} : vector<2x128xf32> to vector<2x32xf32>
    %94 = arith.mulf %91, %78 : vector<2x32xf32>
    %95 = arith.mulf %90, %92 : vector<2x32xf32>
    %96 = arith.addf %94, %95 : vector<2x32xf32>
    %97 = math.tanh %96 : vector<2x32xf32>
    %98 = arith.mulf %93, %97 : vector<2x32xf32>
    %99 = vector.extract_strided_slice %5 {offsets = [10, 0], sizes = [2, 128], strides = [1, 1]} : vector<16x128xf32> to vector<2x128xf32>
    %cst_19 = arith.constant dense<0.000000e+00> : vector<2x128xf32>
    %100 = tpu.matmul %98, %6, %cst_19 {dimension_numbers = #tpu.dot_dimension_numbers<[1], [0], [0], [1], [0, 0, 1, 1], [], []>} : vector<2x32xf32>, vector<32x128xf32>, vector<2x128xf32> -> vector<2x128xf32>
    %101 = arith.addf %99, %100 : vector<2x128xf32>
    %102 = arith.negf %101 : vector<2x128xf32>
    %103 = math.exp %102 : vector<2x128xf32>
    %cst_20 = arith.constant 1.000000e+00 : f32
    %104 = vector.broadcast %cst_20 : f32 to vector<2x128xf32>
    %105 = arith.addf %104, %103 : vector<2x128xf32>
    %106 = arith.divf %104, %105 : vector<2x128xf32>
    %107 = math.tanh %101 : vector<2x128xf32>
    %108 = vector.extract_strided_slice %106 {offsets = [0, 0], sizes = [2, 32], strides = [1, 1]} : vector<2x128xf32> to vector<2x32xf32>
    %109 = vector.extract_strided_slice %106 {offsets = [0, 32], sizes = [2, 32], strides = [1, 1]} : vector<2x128xf32> to vector<2x32xf32>
    %110 = vector.extract_strided_slice %107 {offsets = [0, 64], sizes = [2, 32], strides = [1, 1]} : vector<2x128xf32> to vector<2x32xf32>
    %111 = vector.extract_strided_slice %106 {offsets = [0, 96], sizes = [2, 32], strides = [1, 1]} : vector<2x128xf32> to vector<2x32xf32>
    %112 = arith.mulf %109, %96 : vector<2x32xf32>
    %113 = arith.mulf %108, %110 : vector<2x32xf32>
    %114 = arith.addf %112, %113 : vector<2x32xf32>
    %115 = math.tanh %114 : vector<2x32xf32>
    %116 = arith.mulf %111, %115 : vector<2x32xf32>
    %117 = vector.extract_strided_slice %5 {offsets = [12, 0], sizes = [2, 128], strides = [1, 1]} : vector<16x128xf32> to vector<2x128xf32>
    %cst_21 = arith.constant dense<0.000000e+00> : vector<2x128xf32>
    %118 = tpu.matmul %116, %6, %cst_21 {dimension_numbers = #tpu.dot_dimension_numbers<[1], [0], [0], [1], [0, 0, 1, 1], [], []>} : vector<2x32xf32>, vector<32x128xf32>, vector<2x128xf32> -> vector<2x128xf32>
    %119 = arith.addf %117, %118 : vector<2x128xf32>
    %120 = arith.negf %119 : vector<2x128xf32>
    %121 = math.exp %120 : vector<2x128xf32>
    %cst_22 = arith.constant 1.000000e+00 : f32
    %122 = vector.broadcast %cst_22 : f32 to vector<2x128xf32>
    %123 = arith.addf %122, %121 : vector<2x128xf32>
    %124 = arith.divf %122, %123 : vector<2x128xf32>
    %125 = math.tanh %119 : vector<2x128xf32>
    %126 = vector.extract_strided_slice %124 {offsets = [0, 0], sizes = [2, 32], strides = [1, 1]} : vector<2x128xf32> to vector<2x32xf32>
    %127 = vector.extract_strided_slice %124 {offsets = [0, 32], sizes = [2, 32], strides = [1, 1]} : vector<2x128xf32> to vector<2x32xf32>
    %128 = vector.extract_strided_slice %125 {offsets = [0, 64], sizes = [2, 32], strides = [1, 1]} : vector<2x128xf32> to vector<2x32xf32>
    %129 = vector.extract_strided_slice %124 {offsets = [0, 96], sizes = [2, 32], strides = [1, 1]} : vector<2x128xf32> to vector<2x32xf32>
    %130 = arith.mulf %127, %114 : vector<2x32xf32>
    %131 = arith.mulf %126, %128 : vector<2x32xf32>
    %132 = arith.addf %130, %131 : vector<2x32xf32>
    %133 = math.tanh %132 : vector<2x32xf32>
    %134 = arith.mulf %129, %133 : vector<2x32xf32>
    %135 = vector.extract_strided_slice %5 {offsets = [14, 0], sizes = [2, 128], strides = [1, 1]} : vector<16x128xf32> to vector<2x128xf32>
    %cst_23 = arith.constant dense<0.000000e+00> : vector<2x128xf32>
    %136 = tpu.matmul %134, %6, %cst_23 {dimension_numbers = #tpu.dot_dimension_numbers<[1], [0], [0], [1], [0, 0, 1, 1], [], []>} : vector<2x32xf32>, vector<32x128xf32>, vector<2x128xf32> -> vector<2x128xf32>
    %137 = arith.addf %135, %136 : vector<2x128xf32>
    %138 = arith.negf %137 : vector<2x128xf32>
    %139 = math.exp %138 : vector<2x128xf32>
    %cst_24 = arith.constant 1.000000e+00 : f32
    %140 = vector.broadcast %cst_24 : f32 to vector<2x128xf32>
    %141 = arith.addf %140, %139 : vector<2x128xf32>
    %142 = arith.divf %140, %141 : vector<2x128xf32>
    %143 = math.tanh %137 : vector<2x128xf32>
    %144 = vector.extract_strided_slice %142 {offsets = [0, 0], sizes = [2, 32], strides = [1, 1]} : vector<2x128xf32> to vector<2x32xf32>
    %145 = vector.extract_strided_slice %142 {offsets = [0, 32], sizes = [2, 32], strides = [1, 1]} : vector<2x128xf32> to vector<2x32xf32>
    %146 = vector.extract_strided_slice %143 {offsets = [0, 64], sizes = [2, 32], strides = [1, 1]} : vector<2x128xf32> to vector<2x32xf32>
    %147 = vector.extract_strided_slice %142 {offsets = [0, 96], sizes = [2, 32], strides = [1, 1]} : vector<2x128xf32> to vector<2x32xf32>
    %148 = arith.mulf %145, %132 : vector<2x32xf32>
    %149 = arith.mulf %144, %146 : vector<2x32xf32>
    %150 = arith.addf %148, %149 : vector<2x32xf32>
    %151 = math.tanh %150 : vector<2x32xf32>
    %152 = arith.mulf %147, %151 : vector<2x32xf32>
    %c0_25 = arith.constant 0 : index
    %c0_26 = arith.constant 0 : index
    %153 = vector.load %arg4[%c0_25, %c0_26] : memref<32x32xf32, #tpu.memory_space<vmem>>, vector<32x32xf32>
    %cst_27 = arith.constant dense<0.000000e+00> : vector<2x32xf32>
    %154 = tpu.matmul %152, %153, %cst_27 {dimension_numbers = #tpu.dot_dimension_numbers<[1], [0], [0], [1], [0, 0, 1, 1], [], []>} : vector<2x32xf32>, vector<32x32xf32>, vector<2x32xf32> -> vector<2x32xf32>
    %c0_28 = arith.constant 0 : index
    %c0_29 = arith.constant 0 : index
    %155 = vector.load %arg5[%c0_28, %c0_29] : memref<1x32xf32, #tpu.memory_space<vmem>>, vector<1x32xf32>
    %156 = vector.broadcast %155 : vector<1x32xf32> to vector<2x32xf32>
    %157 = arith.addf %154, %156 : vector<2x32xf32>
    %c0_30 = arith.constant 0 : index
    %c0_31 = arith.constant 0 : index
    %158 = vector.load %arg6[%c0_30, %c0_31] : memref<2x32xf32, #tpu.memory_space<vmem>>, vector<2x32xf32>
    tpu.vector_store %arg6[%c0_30, %c0_31], %157 {strides = array<i32>} : memref<2x32xf32, #tpu.memory_space<vmem>>, vector<2x32xf32>,
    return
  }
}

</mosaic_0001>

<llo_original>
// kernel: tpu_custom_call.1
$region0: #{tpu_custom_call.1}
  #allocation0 [shape = 'u32[]', space=smem, size = 0x4, offset = 0x4, fixed_abs, tag = 'smem constant byte address 0x4 - core index']
  #allocation1 [shape = 'u32[144,128]{1,0:T(1,128)}', space=vmem, size = 0x12000, scoped, tag = 'internal scratch']
  %s0 = inlined_call_operand.hbm [shape: f32[16,32], index: 0, kind: input, shape index: {}]
  %s1 = inlined_call_operand.hbm [shape: f32[32,128], index: 1, kind: input, shape index: {}]
  %s2 = inlined_call_operand.hbm [shape: f32[32,128], index: 2, kind: input, shape index: {}]
  %s3 = inlined_call_operand.vmem [shape: f32[1,128], index: 3, kind: input, shape index: {}]
  %s4 = inlined_call_operand.hbm [shape: f32[32,32], index: 4, kind: input, shape index: {}]
  %s5 = inlined_call_operand.vmem [shape: f32[1,32], index: 5, kind: input, shape index: {}]
  %s6 = inlined_call_operand.hbm [shape: f32[2,32], index: 6, kind: output, shape index: {}]
  %s7 = sld [smem:[#allocation0]]
  $region50: #{tpu_custom_call.1} parent=0
    _
  %s9 = ssub.s32 1, %s7
  %s10 = scalar_select 0, %s9, %s7
  $region1: #{tpu_custom_call.1} parent=0
    #allocation2 [shape = 'u8[8192]{0}', space=vmem, size = 0x2000, scoped, tag = 'input window, operand 0, single buffered']
    #allocation3 [shape = 's32[1]{0}', space=sflag, size = 0x4, scoped, tag = 'scoped memory for tpu_custom_call.1']
    #allocation4 [shape = 's32[1]{0}', space=sflag, size = 0x4, scoped, tag = 'scoped memory for tpu_custom_call.1']
    #allocation5 [shape = 'u8[16384]{0}', space=vmem, size = 0x4000, scoped, tag = 'input window, operand 1, single buffered']
    #allocation6 [shape = 's32[1]{0}', space=sflag, size = 0x4, scoped, tag = 'scoped memory for tpu_custom_call.1']
    #allocation7 [shape = 'u8[16384]{0}', space=vmem, size = 0x4000, scoped, tag = 'input window, operand 2, single buffered']
    #allocation8 [shape = 'u8[16384]{0}', space=vmem, size = 0x4000, scoped, tag = 'input window, operand 4, single buffered']
    #allocation9 [shape = 's32[1]{0}', space=sflag, size = 0x4, scoped, tag = 'scoped memory for tpu_custom_call.1']
    #allocation10 [shape = 'u8[1024]{0}', space=vmem, size = 0x400, scoped, tag = 'output window, operand 0, single buffered']
    %11 = vsyncpa [#allocation3], 0
    %12 = vsyncpa [#allocation6], 0
    %13 = vsyncpa [#allocation9], 0
    %14 = vsyncpa [#allocation4], 0
    // Predicated region
    $region2: #{tpu_custom_call.1} parent=1 // pred_check
      _
    $region3: #{tpu_custom_call.1} parent=1 // pred_check_branch
      %16 = sbr.rel (0) target = $region5
    $region4: #{tpu_custom_call.1} parent=1 // pred_region
      %s18 = ssub.s32 256, 256
      %19 = vsyncadd [#allocation3], %s18
      %s20 = sshll.u32 [#allocation2], 4
      %s21 = int_to_ptr.vmem [resolvable:$true] %s20
      %26 = dma.hbm_to_vmem [thread:$0]  %s0, 256, %s21, [#allocation3], 128, 128, 8
    $region5: #{tpu_custom_call.1} parent=1 // pred_fallthru
      _
    // Predicated region
    $region6: #{tpu_custom_call.1} parent=1 // pred_check
      _
    $region7: #{tpu_custom_call.1} parent=1 // pred_check_branch
      %28 = sbr.rel (0) target = $region9
    $region8: #{tpu_custom_call.1} parent=1 // pred_region
      %s30 = ssub.s32 512, 512
      %31 = vsyncadd [#allocation6], %s30
      %s32 = sshll.u32 [#allocation5], 4
      %s33 = int_to_ptr.vmem [resolvable:$true] %s32
      %38 = dma.hbm_to_vmem [thread:$0]  %s1, 512, %s33, [#allocation6], 128, 128, 8
    $region9: #{tpu_custom_call.1} parent=1 // pred_fallthru
      _
    // Predicated region
    $region10: #{tpu_custom_call.1} parent=1 // pred_check
      _
    $region11: #{tpu_custom_call.1} parent=1 // pred_check_branch
      %40 = sbr.rel (0) target = $region13
    $region12: #{tpu_custom_call.1} parent=1 // pred_region
      %s42 = ssub.s32 512, 512
      %43 = vsyncadd [#allocation6], %s42
      %s44 = sshll.u32 [#allocation7], 4
      %s45 = int_to_ptr.vmem [resolvable:$true] %s44
      %50 = dma.hbm_to_vmem [thread:$0]  %s2, 512, %s45, [#allocation6], 128, 128, 8
    $region13: #{tpu_custom_call.1} parent=1 // pred_fallthru
      _
    // Predicated region
    $region14: #{tpu_custom_call.1} parent=1 // pred_check
      _
    $region15: #{tpu_custom_call.1} parent=1 // pred_check_branch
      %52 = sbr.rel (0) target = $region17
    $region16: #{tpu_custom_call.1} parent=1 // pred_region
      _
    $region17: #{tpu_custom_call.1} parent=1 // pred_fallthru
      _
    // Predicated region
    $region18: #{tpu_custom_call.1} parent=1 // pred_check
      _
    $region19: #{tpu_custom_call.1} parent=1 // pred_check_branch
      %54 = sbr.rel (0) target = $region21
    $region20: #{tpu_custom_call.1} parent=1 // pred_region
      %s56 = ssub.s32 512, 512
      %57 = vsyncadd [#allocation9], %s56
      %s58 = sshll.u32 [#allocation8], 4
      %s59 = int_to_ptr.vmem [resolvable:$true] %s58
      %64 = dma.hbm_to_vmem [thread:$0]  %s4, 512, %s59, [#allocation9], 128, 128, 8
    $region21: #{tpu_custom_call.1} parent=1 // pred_fallthru
      _
    // Predicated region
    $region22: #{tpu_custom_call.1} parent=1 // pred_check
      _
    $region23: #{tpu_custom_call.1} parent=1 // pred_check_branch
      %66 = sbr.rel (0) target = $region25
    $region24: #{tpu_custom_call.1} parent=1 // pred_region
      _
    $region25: #{tpu_custom_call.1} parent=1 // pred_fallthru
      _
    // Predicated region
    $region26: #{tpu_custom_call.1} parent=1 // pred_check
      _
    $region27: #{tpu_custom_call.1} parent=1 // pred_check_branch
      %68 = sbr.rel (0) target = $region29
    $region28: #{tpu_custom_call.1} parent=1 // pred_region
      %69 = dma.done [#allocation3], 256
    $region29: #{tpu_custom_call.1} parent=1 // pred_fallthru
      _
    // Predicated region
    $region30: #{tpu_custom_call.1} parent=1 // pred_check
      _
    $region31: #{tpu_custom_call.1} parent=1 // pred_check_branch
      %71 = sbr.rel (0) target = $region33
    $region32: #{tpu_custom_call.1} parent=1 // pred_region
      %72 = dma.done [#allocation6], 512
    $region33: #{tpu_custom_call.1} parent=1 // pred_fallthru
      _
    // Predicated region
    $region34: #{tpu_custom_call.1} parent=1 // pred_check
      _
    $region35: #{tpu_custom_call.1} parent=1 // pred_check_branch
      %74 = sbr.rel (0) target = $region37
    $region36: #{tpu_custom_call.1} parent=1 // pred_region
      %75 = dma.done [#allocation6], 512
    $region37: #{tpu_custom_call.1} parent=1 // pred_fallthru
      _
    // Predicated region
    $region38: #{tpu_custom_call.1} parent=1 // pred_check
      _
    $region39: #{tpu_custom_call.1} parent=1 // pred_check_branch
      %77 = sbr.rel (0) target = $region41
    $region40: #{tpu_custom_call.1} parent=1 // pred_region
      %78 = dma.done [#allocation9], 512
    $region41: #{tpu_custom_call.1} parent=1 // pred_fallthru
      _
    %v79 = vld [vmem:[#allocation2] sm:$0xff]
    %v80 = vld [vmem:[#allocation2 + $0x8] sm:$0xff]
    %v81 = vld [vmem:[#allocation5] sm:$0xff]
    %v82 = vld [vmem:[#allocation5 + $0x8] sm:$0xff]
    %v83 = vld [vmem:[#allocation5 + $0x10] sm:$0xff]
    %v84 = vld [vmem:[#allocation5 + $0x18] sm:$0xff]
    %v85 = vld [vmem:[%s3] sm:$0x1]
    %v87 = vlaneseq
    %v88 = vshrl.u32 %v87, 7
    %v89 = vsub.s32 0, %v88
    %v90 = vrot.slane %v85, %v89
    %vm92 = vcmask 261120
    %v94 = vsel %vm92, %v79, 0
    %v97 = vsel %vm92, %v80, 0
    %99 = vmatprep.subr.mxu0 0.0
    %100 = vmatpush1.msra.mxu0 %v81
    %101 = vmatprep.subr.mxu0 0.0
    %102 = vmatpush1.msra.mxu0 %v82
    %103 = vmatprep.subr.mxu0 0.0
    %104 = vmatpush1.msra.mxu0 %v83
    %105 = vmatprep.subr.mxu0 0.0
    %106 = vmatpush1.msra.mxu0 %v84
    %107 = vmatprep.subr.mxu0 0.0
    %108 = vmatpush1.msra.mxu0 0.0
    %109 = vmatprep.subr.mxu0 0.0
    %110 = vmatpush1.msra.mxu0 0.0
    %111 = vmatprep.subr.mxu0 0.0
    %112 = vmatpush1.msra.mxu0 0.0
    %113 = vmatprep.subr.mxu0 0.0
    %114 = vmatpush1.msra.mxu0 0.0
    %115 = vmatprep.subr.mxu0 0.0
    %116 = vmatpush1.msra.mxu0 0.0
    %117 = vmatprep.subr.mxu0 0.0
    %118 = vmatpush1.msra.mxu0 0.0
    %119 = vmatprep.subr.mxu0 0.0
    %120 = vmatpush1.msra.mxu0 0.0
    %121 = vmatprep.subr.mxu0 0.0
    %122 = vmatpush1.msra.mxu0 0.0
    %123 = vmatprep.subr.mxu0 0.0
    %124 = vmatpush1.msra.mxu0 0.0
    %125 = vmatprep.subr.mxu0 0.0
    %126 = vmatpush1.msra.mxu0 0.0
    %127 = vmatprep.subr.mxu0 0.0
    %128 = vmatpush1.msra.mxu0 0.0
    %129 = vmatprep.subr.mxu0 0.0
    %130 = vmatpush1.msra.mxu0 0.0
    %131 = vmatprep.subr.mxu0 0.0
    %132 = vmatpush1.msra.mxu0 0.0
    %133 = vmatprep.subr.mxu0 0.0
    %134 = vmatpush1.msra.mxu0 0.0
    %135 = vmatprep.subr.mxu0 0.0
    %136 = vmatpush1.msra.mxu0 0.0
    %137 = vmatprep.subr.mxu0 0.0
    %138 = vmatpush1.msra.mxu0 0.0
    %139 = vmatprep.subr.mxu0 0.0
    %140 = vmatpush1.msra.mxu0 0.0
    %141 = vmatprep.subr.mxu0 0.0
    %142 = vmatpush1.msra.mxu0 0.0
    %143 = vmatprep.subr.mxu0 0.0
    %144 = vmatpush1.msra.mxu0 0.0
    %145 = vmatprep.subr.mxu0 0.0
    %146 = vmatpush1.msra.mxu0 0.0
    %147 = vmatprep.subr.mxu0 0.0
    %148 = vmatpush1.msra.mxu0 0.0
    %149 = vmatprep.subr.mxu0 0.0
    %150 = vmatpush1.msra.mxu0 0.0
    %151 = vmatprep.subr.mxu0 0.0
    %152 = vmatpush1.msra.mxu0 0.0
    %153 = vmatprep.subr.mxu0 0.0
    %154 = vmatpush1.msra.mxu0 0.0
    %155 = vmatprep.subr.mxu0 0.0
    %156 = vmatpush1.msra.mxu0 0.0
    %157 = vmatprep.subr.mxu0 0.0
    %158 = vmatpush1.msra.mxu0 0.0
    %159 = vmatprep.subr.mxu0 0.0
    %160 = vmatpush1.msra.mxu0 0.0
    %161 = vmatprep.subr.mxu0 0.0
    %162 = vmatpush1.msra.mxu0 0.0
    %163 = vmatprep.mubr.f32.mxu0 0.0
    %164 = vmatmul.mubr.f32.gmra.mrb[0].mxu0 %v94
    %v165 = vpop.f32.mrb[0].mxu0
    %v166 = vadd.f32 %v90, %v165
    %v167 = vpop.f32.mrb[0].mxu0
    %168 = vmatprep.mubr.f32.mxu0 0.0
    %169 = vmatmul.mubr.f32.gmra.mrb[0].mxu0 %v97
    %v170 = vpop.f32.mrb[0].mxu0
    %v171 = vadd.f32 %v90, %v170
    %v172 = vpop.f32.mrb[0].mxu0
    %173 = vdwg.mxu0
    %v174 = vld [vmem:[#allocation7] sm:$0xff]
    %v175 = vld [vmem:[#allocation7 + $0x8] sm:$0xff]
    %v176 = vld [vmem:[#allocation7 + $0x10] sm:$0xff]
    %v177 = vld [vmem:[#allocation7 + $0x18] sm:$0xff]
    %v179 = vsel %vm92, 0.0, 0
    %181 = vmatprep.subr.mxu0 0.0
    %182 = vmatpush1.msra.mxu0 %v174
    %183 = vmatprep.subr.mxu0 0.0
    %184 = vmatpush1.msra.mxu0 %v175
    %185 = vmatprep.subr.mxu0 0.0
    %186 = vmatpush1.msra.mxu0 %v176
    %187 = vmatprep.subr.mxu0 0.0
    %188 = vmatpush1.msra.mxu0 %v177
    %189 = vmatprep.subr.mxu0 0.0
    %190 = vmatpush1.msra.mxu0 0.0
    %191 = vmatprep.subr.mxu0 0.0
    %192 = vmatpush1.msra.mxu0 0.0
    %193 = vmatprep.subr.mxu0 0.0
    %194 = vmatpush1.msra.mxu0 0.0
    %195 = vmatprep.subr.mxu0 0.0
    %196 = vmatpush1.msra.mxu0 0.0
    %197 = vmatprep.subr.mxu0 0.0
    %198 = vmatpush1.msra.mxu0 0.0
    %199 = vmatprep.subr.mxu0 0.0
    %200 = vmatpush1.msra.mxu0 0.0
    %201 = vmatprep.subr.mxu0 0.0
    %202 = vmatpush1.msra.mxu0 0.0
    %203 = vmatprep.subr.mxu0 0.0
    %204 = vmatpush1.msra.mxu0 0.0
    %205 = vmatprep.subr.mxu0 0.0
    %206 = vmatpush1.msra.mxu0 0.0
    %207 = vmatprep.subr.mxu0 0.0
    %208 = vmatpush1.msra.mxu0 0.0
    %209 = vmatprep.subr.mxu0 0.0
    %210 = vmatpush1.msra.mxu0 0.0
    %211 = vmatprep.subr.mxu0 0.0
    %212 = vmatpush1.msra.mxu0 0.0
    %213 = vmatprep.subr.mxu0 0.0
    %214 = vmatpush1.msra.mxu0 0.0
    %215 = vmatprep.subr.mxu0 0.0
    %216 = vmatpush1.msra.mxu0 0.0
    %217 = vmatprep.subr.mxu0 0.0
    %218 = vmatpush1.msra.mxu0 0.0
    %219 = vmatprep.subr.mxu0 0.0
    %220 = vmatpush1.msra.mxu0 0.0
    %221 = vmatprep.subr.mxu0 0.0
    %222 = vmatpush1.msra.mxu0 0.0
    %223 = vmatprep.subr.mxu0 0.0
    %224 = vmatpush1.msra.mxu0 0.0
    %225 = vmatprep.subr.mxu0 0.0
    %226 = vmatpush1.msra.mxu0 0.0
    %227 = vmatprep.subr.mxu0 0.0
    %228 = vmatpush1.msra.mxu0 0.0
    %229 = vmatprep.subr.mxu0 0.0
    %230 = vmatpush1.msra.mxu0 0.0
    %231 = vmatprep.subr.mxu0 0.0
    %232 = vmatpush1.msra.mxu0 0.0
    %233 = vmatprep.subr.mxu0 0.0
    %234 = vmatpush1.msra.mxu0 0.0
    %235 = vmatprep.subr.mxu0 0.0
    %236 = vmatpush1.msra.mxu0 0.0
    %237 = vmatprep.subr.mxu0 0.0
    %238 = vmatpush1.msra.mxu0 0.0
    %239 = vmatprep.subr.mxu0 0.0
    %240 = vmatpush1.msra.mxu0 0.0
    %241 = vmatprep.subr.mxu0 0.0
    %242 = vmatpush1.msra.mxu0 0.0
    %243 = vmatprep.subr.mxu0 0.0
    %244 = vmatpush1.msra.mxu0 0.0
    %245 = vmatprep.mubr.f32.mxu0 0.0
    %246 = vmatmul.mubr.f32.gmra.mrb[0].mxu0 %v179
    %v247 = vpop.f32.mrb[0].mxu0
    %v248 = vadd.f32 0.0, %v247
    %v249 = vpop.f32.mrb[0].mxu0
    %250 = vdwg.mxu0
    %v251 = vadd.f32 %v166, %v248
    %v252 = vxor.u32 %v251, 2147483648
    %v253 = vmul.f32 %v252, 1.442695
    %v254 = vpow.pop %v253
    %v255 = vadd.f32 %v254, 1.0
    %v256 = vrcp.pop %v255
    %v257 = vmul.f32 1.0, %v256
    %v258 = vtanh.pop %v251
    %v259 = vmul.f32 %v257, 0.0
    %261 = vrot.lane.b32.xlu0 %v258, 64
    %v262 = vpop.permute.xlu0 %261
    %v264 = vmul.f32 %v257, %v262
    %266 = vrot.lane.b32.xlu0 %v264, 32
    %v267 = vpop.permute.xlu0 %266
    %v269 = vadd.f32 %v259, %v267
    %v270 = vtanh.pop %v269
    %272 = vrot.lane.b32.xlu0 %v270, 64
    %v273 = vpop.permute.xlu0 %272
    %v275 = vmul.f32 %v257, %v273
    %277 = vrot.lane.b32.xlu0 %v275, 32
    %v278 = vpop.permute.xlu0 %277
    %v279 = vsel %vm92, %v278, 0
    %281 = vmatprep.subr.mxu0 0.0
    %282 = vmatpush1.msra.mxu0 %v174
    %283 = vmatprep.subr.mxu0 0.0
    %284 = vmatpush1.msra.mxu0 %v175
    %285 = vmatprep.subr.mxu0 0.0
    %286 = vmatpush1.msra.mxu0 %v176
    %287 = vmatprep.subr.mxu0 0.0
    %288 = vmatpush1.msra.mxu0 %v177
    %289 = vmatprep.subr.mxu0 0.0
    %290 = vmatpush1.msra.mxu0 0.0
    %291 = vmatprep.subr.mxu0 0.0
    %292 = vmatpush1.msra.mxu0 0.0
    %293 = vmatprep.subr.mxu0 0.0
    %294 = vmatpush1.msra.mxu0 0.0
    %295 = vmatprep.subr.mxu0 0.0
    %296 = vmatpush1.msra.mxu0 0.0
    %297 = vmatprep.subr.mxu0 0.0
    %298 = vmatpush1.msra.mxu0 0.0
    %299 = vmatprep.subr.mxu0 0.0
    %300 = vmatpush1.msra.mxu0 0.0
    %301 = vmatprep.subr.mxu0 0.0
    %302 = vmatpush1.msra.mxu0 0.0
    %303 = vmatprep.subr.mxu0 0.0
    %304 = vmatpush1.msra.mxu0 0.0
    %305 = vmatprep.subr.mxu0 0.0
    %306 = vmatpush1.msra.mxu0 0.0
    %307 = vmatprep.subr.mxu0 0.0
    %308 = vmatpush1.msra.mxu0 0.0
    %309 = vmatprep.subr.mxu0 0.0
    %310 = vmatpush1.msra.mxu0 0.0
    %311 = vmatprep.subr.mxu0 0.0
    %312 = vmatpush1.msra.mxu0 0.0
    %313 = vmatprep.subr.mxu0 0.0
    %314 = vmatpush1.msra.mxu0 0.0
    %315 = vmatprep.subr.mxu0 0.0
    %316 = vmatpush1.msra.mxu0 0.0
    %317 = vmatprep.subr.mxu0 0.0
    %318 = vmatpush1.msra.mxu0 0.0
    %319 = vmatprep.subr.mxu0 0.0
    %320 = vmatpush1.msra.mxu0 0.0
    %321 = vmatprep.subr.mxu0 0.0
    %322 = vmatpush1.msra.mxu0 0.0
    %323 = vmatprep.subr.mxu0 0.0
    %324 = vmatpush1.msra.mxu0 0.0
    %325 = vmatprep.subr.mxu0 0.0
    %326 = vmatpush1.msra.mxu0 0.0
    %327 = vmatprep.subr.mxu0 0.0
    %328 = vmatpush1.msra.mxu0 0.0
    %329 = vmatprep.subr.mxu0 0.0
    %330 = vmatpush1.msra.mxu0 0.0
    %331 = vmatprep.subr.mxu0 0.0
    %332 = vmatpush1.msra.mxu0 0.0
    %333 = vmatprep.subr.mxu0 0.0
    %334 = vmatpush1.msra.mxu0 0.0
    %335 = vmatprep.subr.mxu0 0.0
    %336 = vmatpush1.msra.mxu0 0.0
    %337 = vmatprep.subr.mxu0 0.0
    %338 = vmatpush1.msra.mxu0 0.0
    %339 = vmatprep.subr.mxu0 0.0
    %340 = vmatpush1.msra.mxu0 0.0
    %341 = vmatprep.subr.mxu0 0.0
    %342 = vmatpush1.msra.mxu0 0.0
    %343 = vmatprep.subr.mxu0 0.0
    %344 = vmatpush1.msra.mxu0 0.0
    %345 = vmatprep.mubr.f32.mxu0 0.0
    %346 = vmatmul.mubr.f32.gmra.mrb[0].mxu0 %v279
    %v347 = vpop.f32.mrb[0].mxu0
    %v348 = vadd.f32 0.0, %v347
    %v349 = vpop.f32.mrb[0].mxu0
    %350 = vdwg.mxu0
    %v352 = vrot.slane %v348, 6
    %v354 = vadd.f32 %v166, %v352
    %v355 = vxor.u32 %v354, 2147483648
    %v356 = vmul.f32 %v355, 1.442695
    %v357 = vpow.pop %v356
    %v358 = vadd.f32 %v357, 1.0
    %v359 = vrcp.pop %v358
    %v360 = vmul.f32 1.0, %v359
    %v361 = vtanh.pop %v354
    %v363 = vrot.slane %v269, 6
    %v365 = vmul.f32 %v360, %v363
    %367 = vrot.lane.b32.xlu0 %v361, 64
    %v368 = vpop.permute.xlu0 %367
    %v370 = vmul.f32 %v360, %v368
    %372 = vrot.lane.b32.xlu0 %v370, 32
    %v373 = vpop.permute.xlu0 %372
    %v375 = vadd.f32 %v365, %v373
    %v376 = vtanh.pop %v375
    %378 = vrot.lane.b32.xlu0 %v376, 64
    %v379 = vpop.permute.xlu0 %378
    %v381 = vmul.f32 %v360, %v379
    %v383 = vrot.slane %v381, 2
    %384 = vrot.lane.b32.xlu0 %v383, 32
    %v385 = vpop.permute.xlu0 %384
    %v386 = vsel %vm92, %v385, 0
    %388 = vmatprep.subr.mxu0 0.0
    %389 = vmatpush1.msra.mxu0 %v174
    %390 = vmatprep.subr.mxu0 0.0
    %391 = vmatpush1.msra.mxu0 %v175
    %392 = vmatprep.subr.mxu0 0.0
    %393 = vmatpush1.msra.mxu0 %v176
    %394 = vmatprep.subr.mxu0 0.0
    %395 = vmatpush1.msra.mxu0 %v177
    %396 = vmatprep.subr.mxu0 0.0
    %397 = vmatpush1.msra.mxu0 0.0
    %398 = vmatprep.subr.mxu0 0.0
    %399 = vmatpush1.msra.mxu0 0.0
    %400 = vmatprep.subr.mxu0 0.0
    %401 = vmatpush1.msra.mxu0 0.0
    %402 = vmatprep.subr.mxu0 0.0
    %403 = vmatpush1.msra.mxu0 0.0
    %404 = vmatprep.subr.mxu0 0.0
    %405 = vmatpush1.msra.mxu0 0.0
    %406 = vmatprep.subr.mxu0 0.0
    %407 = vmatpush1.msra.mxu0 0.0
    %408 = vmatprep.subr.mxu0 0.0
    %409 = vmatpush1.msra.mxu0 0.0
    %410 = vmatprep.subr.mxu0 0.0
    %411 = vmatpush1.msra.mxu0 0.0
    %412 = vmatprep.subr.mxu0 0.0
    %413 = vmatpush1.msra.mxu0 0.0
    %414 = vmatprep.subr.mxu0 0.0
    %415 = vmatpush1.msra.mxu0 0.0
    %416 = vmatprep.subr.mxu0 0.0
    %417 = vmatpush1.msra.mxu0 0.0
    %418 = vmatprep.subr.mxu0 0.0
    %419 = vmatpush1.msra.mxu0 0.0
    %420 = vmatprep.subr.mxu0 0.0
    %421 = vmatpush1.msra.mxu0 0.0
    %422 = vmatprep.subr.mxu0 0.0
    %423 = vmatpush1.msra.mxu0 0.0
    %424 = vmatprep.subr.mxu0 0.0
    %425 = vmatpush1.msra.mxu0 0.0
    %426 = vmatprep.subr.mxu0 0.0
    %427 = vmatpush1.msra.mxu0 0.0
    %428 = vmatprep.subr.mxu0 0.0
    %429 = vmatpush1.msra.mxu0 0.0
    %430 = vmatprep.subr.mxu0 0.0
    %431 = vmatpush1.msra.mxu0 0.0
    %432 = vmatprep.subr.mxu0 0.0
    %433 = vmatpush1.msra.mxu0 0.0
    %434 = vmatprep.subr.mxu0 0.0
    %435 = vmatpush1.msra.mxu0 0.0
    %436 = vmatprep.subr.mxu0 0.0
    %437 = vmatpush1.msra.mxu0 0.0
    %438 = vmatprep.subr.mxu0 0.0
    %439 = vmatpush1.msra.mxu0 0.0
    %440 = vmatprep.subr.mxu0 0.0
    %441 = vmatpush1.msra.mxu0 0.0
    %442 = vmatprep.subr.mxu0 0.0
    %443 = vmatpush1.msra.mxu0 0.0
    %444 = vmatprep.subr.mxu0 0.0
    %445 = vmatpush1.msra.mxu0 0.0
    %446 = vmatprep.subr.mxu0 0.0
    %447 = vmatpush1.msra.mxu0 0.0
    %448 = vmatprep.subr.mxu0 0.0
    %449 = vmatpush1.msra.mxu0 0.0
    %450 = vmatprep.subr.mxu0 0.0
    %451 = vmatpush1.msra.mxu0 0.0
    %452 = vmatprep.mubr.f32.mxu0 0.0
    %453 = vmatmul.mubr.f32.gmra.mrb[0].mxu0 %v386
    %v454 = vpop.f32.mrb[0].mxu0
    %v455 = vadd.f32 0.0, %v454
    %v456 = vpop.f32.mrb[0].mxu0
    %457 = vdwg.mxu0
    %v459 = vrot.slane %v455, 4
    %v461 = vadd.f32 %v166, %v459
    %v462 = vxor.u32 %v461, 2147483648
    %v463 = vmul.f32 %v462, 1.442695
    %v464 = vpow.pop %v463
    %v465 = vadd.f32 %v464, 1.0
    %v466 = vrcp.pop %v465
    %v467 = vmul.f32 1.0, %v466
    %v468 = vtanh.pop %v461
    %v470 = vrot.slane %v375, 6
    %v472 = vmul.f32 %v467, %v470
    %474 = vrot.lane.b32.xlu0 %v468, 64
    %v475 = vpop.permute.xlu0 %474
    %v477 = vmul.f32 %v467, %v475
    %479 = vrot.lane.b32.xlu0 %v477, 32
    %v480 = vpop.permute.xlu0 %479
    %v482 = vadd.f32 %v472, %v480
    %v483 = vtanh.pop %v482
    %485 = vrot.lane.b32.xlu0 %v483, 64
    %v486 = vpop.permute.xlu0 %485
    %v488 = vmul.f32 %v467, %v486
    %v490 = vrot.slane %v488, 4
    %491 = vrot.lane.b32.xlu0 %v490, 32
    %v492 = vpop.permute.xlu0 %491
    %v493 = vsel %vm92, %v492, 0
    %495 = vmatprep.subr.mxu0 0.0
    %496 = vmatpush1.msra.mxu0 %v174
    %497 = vmatprep.subr.mxu0 0.0
    %498 = vmatpush1.msra.mxu0 %v175
    %499 = vmatprep.subr.mxu0 0.0
    %500 = vmatpush1.msra.mxu0 %v176
    %501 = vmatprep.subr.mxu0 0.0
    %502 = vmatpush1.msra.mxu0 %v177
    %503 = vmatprep.subr.mxu0 0.0
    %504 = vmatpush1.msra.mxu0 0.0
    %505 = vmatprep.subr.mxu0 0.0
    %506 = vmatpush1.msra.mxu0 0.0
    %507 = vmatprep.subr.mxu0 0.0
    %508 = vmatpush1.msra.mxu0 0.0
    %509 = vmatprep.subr.mxu0 0.0
    %510 = vmatpush1.msra.mxu0 0.0
    %511 = vmatprep.subr.mxu0 0.0
    %512 = vmatpush1.msra.mxu0 0.0
    %513 = vmatprep.subr.mxu0 0.0
    %514 = vmatpush1.msra.mxu0 0.0
    %515 = vmatprep.subr.mxu0 0.0
    %516 = vmatpush1.msra.mxu0 0.0
    %517 = vmatprep.subr.mxu0 0.0
    %518 = vmatpush1.msra.mxu0 0.0
    %519 = vmatprep.subr.mxu0 0.0
    %520 = vmatpush1.msra.mxu0 0.0
    %521 = vmatprep.subr.mxu0 0.0
    %522 = vmatpush1.msra.mxu0 0.0
    %523 = vmatprep.subr.mxu0 0.0
    %524 = vmatpush1.msra.mxu0 0.0
    %525 = vmatprep.subr.mxu0 0.0
    %526 = vmatpush1.msra.mxu0 0.0
    %527 = vmatprep.subr.mxu0 0.0
    %528 = vmatpush1.msra.mxu0 0.0
    %529 = vmatprep.subr.mxu0 0.0
    %530 = vmatpush1.msra.mxu0 0.0
    %531 = vmatprep.subr.mxu0 0.0
    %532 = vmatpush1.msra.mxu0 0.0
    %533 = vmatprep.subr.mxu0 0.0
    %534 = vmatpush1.msra.mxu0 0.0
    %535 = vmatprep.subr.mxu0 0.0
    %536 = vmatpush1.msra.mxu0 0.0
    %537 = vmatprep.subr.mxu0 0.0
    %538 = vmatpush1.msra.mxu0 0.0
    %539 = vmatprep.subr.mxu0 0.0
    %540 = vmatpush1.msra.mxu0 0.0
    %541 = vmatprep.subr.mxu0 0.0
    %542 = vmatpush1.msra.mxu0 0.0
    %543 = vmatprep.subr.mxu0 0.0
    %544 = vmatpush1.msra.mxu0 0.0
    %545 = vmatprep.subr.mxu0 0.0
    %546 = vmatpush1.msra.mxu0 0.0
    %547 = vmatprep.subr.mxu0 0.0
    %548 = vmatpush1.msra.mxu0 0.0
    %549 = vmatprep.subr.mxu0 0.0
    %550 = vmatpush1.msra.mxu0 0.0
    %551 = vmatprep.subr.mxu0 0.0
    %552 = vmatpush1.msra.mxu0 0.0
    %553 = vmatprep.subr.mxu0 0.0
    %554 = vmatpush1.msra.mxu0 0.0
    %555 = vmatprep.subr.mxu0 0.0
    %556 = vmatpush1.msra.mxu0 0.0
    %557 = vmatprep.subr.mxu0 0.0
    %558 = vmatpush1.msra.mxu0 0.0
    %559 = vmatprep.mubr.f32.mxu0 0.0
    %560 = vmatmul.mubr.f32.gmra.mrb[0].mxu0 %v493
    %v561 = vpop.f32.mrb[0].mxu0
    %v562 = vadd.f32 0.0, %v561
    %v563 = vpop.f32.mrb[0].mxu0
    %564 = vdwg.mxu0
    %v566 = vrot.slane %v562, 2
    %v568 = vadd.f32 %v166, %v566
    %v569 = vxor.u32 %v568, 2147483648
    %v570 = vmul.f32 %v569, 1.442695
    %v571 = vpow.pop %v570
    %v572 = vadd.f32 %v571, 1.0
    %v573 = vrcp.pop %v572
    %v574 = vmul.f32 1.0, %v573
    %v575 = vtanh.pop %v568
    %v577 = vrot.slane %v482, 6
    %v579 = vmul.f32 %v574, %v577
    %581 = vrot.lane.b32.xlu0 %v575, 64
    %v582 = vpop.permute.xlu0 %581
    %v584 = vmul.f32 %v574, %v582
    %586 = vrot.lane.b32.xlu0 %v584, 32
    %v587 = vpop.permute.xlu0 %586
    %v589 = vadd.f32 %v579, %v587
    %v590 = vtanh.pop %v589
    %592 = vrot.lane.b32.xlu0 %v590, 64
    %v593 = vpop.permute.xlu0 %592
    %v595 = vmul.f32 %v574, %v593
    %v597 = vrot.slane %v595, 6
    %598 = vrot.lane.b32.xlu0 %v597, 32
    %v599 = vpop.permute.xlu0 %598
    %v600 = vsel %vm92, %v599, 0
    %602 = vmatprep.subr.mxu0 0.0
    %603 = vmatpush1.msra.mxu0 %v174
    %604 = vmatprep.subr.mxu0 0.0
    %605 = vmatpush1.msra.mxu0 %v175
    %606 = vmatprep.subr.mxu0 0.0
    %607 = vmatpush1.msra.mxu0 %v176
    %608 = vmatprep.subr.mxu0 0.0
    %609 = vmatpush1.msra.mxu0 %v177
    %610 = vmatprep.subr.mxu0 0.0
    %611 = vmatpush1.msra.mxu0 0.0
    %612 = vmatprep.subr.mxu0 0.0
    %613 = vmatpush1.msra.mxu0 0.0
    %614 = vmatprep.subr.mxu0 0.0
    %615 = vmatpush1.msra.mxu0 0.0
    %616 = vmatprep.subr.mxu0 0.0
    %617 = vmatpush1.msra.mxu0 0.0
    %618 = vmatprep.subr.mxu0 0.0
    %619 = vmatpush1.msra.mxu0 0.0
    %620 = vmatprep.subr.mxu0 0.0
    %621 = vmatpush1.msra.mxu0 0.0
    %622 = vmatprep.subr.mxu0 0.0
    %623 = vmatpush1.msra.mxu0 0.0
    %624 = vmatprep.subr.mxu0 0.0
    %625 = vmatpush1.msra.mxu0 0.0
    %626 = vmatprep.subr.mxu0 0.0
    %627 = vmatpush1.msra.mxu0 0.0
    %628 = vmatprep.subr.mxu0 0.0
    %629 = vmatpush1.msra.mxu0 0.0
    %630 = vmatprep.subr.mxu0 0.0
    %631 = vmatpush1.msra.mxu0 0.0
    %632 = vmatprep.subr.mxu0 0.0
    %633 = vmatpush1.msra.mxu0 0.0
    %634 = vmatprep.subr.mxu0 0.0
    %635 = vmatpush1.msra.mxu0 0.0
    %636 = vmatprep.subr.mxu0 0.0
    %637 = vmatpush1.msra.mxu0 0.0
    %638 = vmatprep.subr.mxu0 0.0
    %639 = vmatpush1.msra.mxu0 0.0
    %640 = vmatprep.subr.mxu0 0.0
    %641 = vmatpush1.msra.mxu0 0.0
    %642 = vmatprep.subr.mxu0 0.0
    %643 = vmatpush1.msra.mxu0 0.0
    %644 = vmatprep.subr.mxu0 0.0
    %645 = vmatpush1.msra.mxu0 0.0
    %646 = vmatprep.subr.mxu0 0.0
    %647 = vmatpush1.msra.mxu0 0.0
    %648 = vmatprep.subr.mxu0 0.0
    %649 = vmatpush1.msra.mxu0 0.0
    %650 = vmatprep.subr.mxu0 0.0
    %651 = vmatpush1.msra.mxu0 0.0
    %652 = vmatprep.subr.mxu0 0.0
    %653 = vmatpush1.msra.mxu0 0.0
    %654 = vmatprep.subr.mxu0 0.0
    %655 = vmatpush1.msra.mxu0 0.0
    %656 = vmatprep.subr.mxu0 0.0
    %657 = vmatpush1.msra.mxu0 0.0
    %658 = vmatprep.subr.mxu0 0.0
    %659 = vmatpush1.msra.mxu0 0.0
    %660 = vmatprep.subr.mxu0 0.0
    %661 = vmatpush1.msra.mxu0 0.0
    %662 = vmatprep.subr.mxu0 0.0
    %663 = vmatpush1.msra.mxu0 0.0
    %664 = vmatprep.subr.mxu0 0.0
    %665 = vmatpush1.msra.mxu0 0.0
    %666 = vmatprep.mubr.f32.mxu0 0.0
    %667 = vmatmul.mubr.f32.gmra.mrb[0].mxu0 %v600
    %v668 = vpop.f32.mrb[0].mxu0
    %v669 = vadd.f32 0.0, %v668
    %v670 = vpop.f32.mrb[0].mxu0
    %671 = vdwg.mxu0
    %v672 = vadd.f32 %v171, %v669
    %v673 = vxor.u32 %v672, 2147483648
    %v674 = vmul.f32 %v673, 1.442695
    %v675 = vpow.pop %v674
    %v676 = vadd.f32 %v675, 1.0
    %v677 = vrcp.pop %v676
    %v678 = vmul.f32 1.0, %v677
    %v679 = vtanh.pop %v672
    %v681 = vrot.slane %v589, 6
    %v683 = vmul.f32 %v678, %v681
    %685 = vrot.lane.b32.xlu0 %v679, 64
    %v686 = vpop.permute.xlu0 %685
    %v688 = vmul.f32 %v678, %v686
    %690 = vrot.lane.b32.xlu0 %v688, 32
    %v691 = vpop.permute.xlu0 %690
    %v693 = vadd.f32 %v683, %v691
    %v694 = vtanh.pop %v693
    %696 = vrot.lane.b32.xlu0 %v694, 64
    %v697 = vpop.permute.xlu0 %696
    %v699 = vmul.f32 %v678, %v697
    %701 = vrot.lane.b32.xlu0 %v699, 32
    %v702 = vpop.permute.xlu0 %701
    %v703 = vsel %vm92, %v702, 0
    %705 = vmatprep.subr.mxu0 0.0
    %706 = vmatpush1.msra.mxu0 %v174
    %707 = vmatprep.subr.mxu0 0.0
    %708 = vmatpush1.msra.mxu0 %v175
    %709 = vmatprep.subr.mxu0 0.0
    %710 = vmatpush1.msra.mxu0 %v176
    %711 = vmatprep.subr.mxu0 0.0
    %712 = vmatpush1.msra.mxu0 %v177
    %713 = vmatprep.subr.mxu0 0.0
    %714 = vmatpush1.msra.mxu0 0.0
    %715 = vmatprep.subr.mxu0 0.0
    %716 = vmatpush1.msra.mxu0 0.0
    %717 = vmatprep.subr.mxu0 0.0
    %718 = vmatpush1.msra.mxu0 0.0
    %719 = vmatprep.subr.mxu0 0.0
    %720 = vmatpush1.msra.mxu0 0.0
    %721 = vmatprep.subr.mxu0 0.0
    %722 = vmatpush1.msra.mxu0 0.0
    %723 = vmatprep.subr.mxu0 0.0
    %724 = vmatpush1.msra.mxu0 0.0
    %725 = vmatprep.subr.mxu0 0.0
    %726 = vmatpush1.msra.mxu0 0.0
    %727 = vmatprep.subr.mxu0 0.0
    %728 = vmatpush1.msra.mxu0 0.0
    %729 = vmatprep.subr.mxu0 0.0
    %730 = vmatpush1.msra.mxu0 0.0
    %731 = vmatprep.subr.mxu0 0.0
    %732 = vmatpush1.msra.mxu0 0.0
    %733 = vmatprep.subr.mxu0 0.0
    %734 = vmatpush1.msra.mxu0 0.0
    %735 = vmatprep.subr.mxu0 0.0
    %736 = vmatpush1.msra.mxu0 0.0
    %737 = vmatprep.subr.mxu0 0.0
    %738 = vmatpush1.msra.mxu0 0.0
    %739 = vmatprep.subr.mxu0 0.0
    %740 = vmatpush1.msra.mxu0 0.0
    %741 = vmatprep.subr.mxu0 0.0
    %742 = vmatpush1.msra.mxu0 0.0
    %743 = vmatprep.subr.mxu0 0.0
    %744 = vmatpush1.msra.mxu0 0.0
    %745 = vmatprep.subr.mxu0 0.0
    %746 = vmatpush1.msra.mxu0 0.0
    %747 = vmatprep.subr.mxu0 0.0
    %748 = vmatpush1.msra.mxu0 0.0
    %749 = vmatprep.subr.mxu0 0.0
    %750 = vmatpush1.msra.mxu0 0.0
    %751 = vmatprep.subr.mxu0 0.0
    %752 = vmatpush1.msra.mxu0 0.0
    %753 = vmatprep.subr.mxu0 0.0
    %754 = vmatpush1.msra.mxu0 0.0
    %755 = vmatprep.subr.mxu0 0.0
    %756 = vmatpush1.msra.mxu0 0.0
    %757 = vmatprep.subr.mxu0 0.0
    %758 = vmatpush1.msra.mxu0 0.0
    %759 = vmatprep.subr.mxu0 0.0
    %760 = vmatpush1.msra.mxu0 0.0
    %761 = vmatprep.subr.mxu0 0.0
    %762 = vmatpush1.msra.mxu0 0.0
    %763 = vmatprep.subr.mxu0 0.0
    %764 = vmatpush1.msra.mxu0 0.0
    %765 = vmatprep.subr.mxu0 0.0
    %766 = vmatpush1.msra.mxu0 0.0
    %767 = vmatprep.subr.mxu0 0.0
    %768 = vmatpush1.msra.mxu0 0.0
    %769 = vmatprep.mubr.f32.mxu0 0.0
    %770 = vmatmul.mubr.f32.gmra.mrb[0].mxu0 %v703
    %v771 = vpop.f32.mrb[0].mxu0
    %v772 = vadd.f32 0.0, %v771
    %v773 = vpop.f32.mrb[0].mxu0
    %774 = vdwg.mxu0
    %v776 = vrot.slane %v772, 6
    %v778 = vadd.f32 %v171, %v776
    %v779 = vxor.u32 %v778, 2147483648
    %v780 = vmul.f32 %v779, 1.442695
    %v781 = vpow.pop %v780
    %v782 = vadd.f32 %v781, 1.0
    %v783 = vrcp.pop %v782
    %v784 = vmul.f32 1.0, %v783
    %v785 = vtanh.pop %v778
    %v787 = vrot.slane %v693, 6
    %v789 = vmul.f32 %v784, %v787
    %791 = vrot.lane.b32.xlu0 %v785, 64
    %v792 = vpop.permute.xlu0 %791
    %v794 = vmul.f32 %v784, %v792
    %796 = vrot.lane.b32.xlu0 %v794, 32
    %v797 = vpop.permute.xlu0 %796
    %v799 = vadd.f32 %v789, %v797
    %v800 = vtanh.pop %v799
    %802 = vrot.lane.b32.xlu0 %v800, 64
    %v803 = vpop.permute.xlu0 %802
    %v805 = vmul.f32 %v784, %v803
    %v807 = vrot.slane %v805, 2
    %808 = vrot.lane.b32.xlu0 %v807, 32
    %v809 = vpop.permute.xlu0 %808
    %v810 = vsel %vm92, %v809, 0
    %812 = vmatprep.subr.mxu0 0.0
    %813 = vmatpush1.msra.mxu0 %v174
    %814 = vmatprep.subr.mxu0 0.0
    %815 = vmatpush1.msra.mxu0 %v175
    %816 = vmatprep.subr.mxu0 0.0
    %817 = vmatpush1.msra.mxu0 %v176
    %818 = vmatprep.subr.mxu0 0.0
    %819 = vmatpush1.msra.mxu0 %v177
    %820 = vmatprep.subr.mxu0 0.0
    %821 = vmatpush1.msra.mxu0 0.0
    %822 = vmatprep.subr.mxu0 0.0
    %823 = vmatpush1.msra.mxu0 0.0
    %824 = vmatprep.subr.mxu0 0.0
    %825 = vmatpush1.msra.mxu0 0.0
    %826 = vmatprep.subr.mxu0 0.0
    %827 = vmatpush1.msra.mxu0 0.0
    %828 = vmatprep.subr.mxu0 0.0
    %829 = vmatpush1.msra.mxu0 0.0
    %830 = vmatprep.subr.mxu0 0.0
    %831 = vmatpush1.msra.mxu0 0.0
    %832 = vmatprep.subr.mxu0 0.0
    %833 = vmatpush1.msra.mxu0 0.0
    %834 = vmatprep.subr.mxu0 0.0
    %835 = vmatpush1.msra.mxu0 0.0
    %836 = vmatprep.subr.mxu0 0.0
    %837 = vmatpush1.msra.mxu0 0.0
    %838 = vmatprep.subr.mxu0 0.0
    %839 = vmatpush1.msra.mxu0 0.0
    %840 = vmatprep.subr.mxu0 0.0
    %841 = vmatpush1.msra.mxu0 0.0
    %842 = vmatprep.subr.mxu0 0.0
    %843 = vmatpush1.msra.mxu0 0.0
    %844 = vmatprep.subr.mxu0 0.0
    %845 = vmatpush1.msra.mxu0 0.0
    %846 = vmatprep.subr.mxu0 0.0
    %847 = vmatpush1.msra.mxu0 0.0
    %848 = vmatprep.subr.mxu0 0.0
    %849 = vmatpush1.msra.mxu0 0.0
    %850 = vmatprep.subr.mxu0 0.0
    %851 = vmatpush1.msra.mxu0 0.0
    %852 = vmatprep.subr.mxu0 0.0
    %853 = vmatpush1.msra.mxu0 0.0
    %854 = vmatprep.subr.mxu0 0.0
    %855 = vmatpush1.msra.mxu0 0.0
    %856 = vmatprep.subr.mxu0 0.0
    %857 = vmatpush1.msra.mxu0 0.0
    %858 = vmatprep.subr.mxu0 0.0
    %859 = vmatpush1.msra.mxu0 0.0
    %860 = vmatprep.subr.mxu0 0.0
    %861 = vmatpush1.msra.mxu0 0.0
    %862 = vmatprep.subr.mxu0 0.0
    %863 = vmatpush1.msra.mxu0 0.0
    %864 = vmatprep.subr.mxu0 0.0
    %865 = vmatpush1.msra.mxu0 0.0
    %866 = vmatprep.subr.mxu0 0.0
    %867 = vmatpush1.msra.mxu0 0.0
    %868 = vmatprep.subr.mxu0 0.0
    %869 = vmatpush1.msra.mxu0 0.0
    %870 = vmatprep.subr.mxu0 0.0
    %871 = vmatpush1.msra.mxu0 0.0
    %872 = vmatprep.subr.mxu0 0.0
    %873 = vmatpush1.msra.mxu0 0.0
    %874 = vmatprep.subr.mxu0 0.0
    %875 = vmatpush1.msra.mxu0 0.0
    %876 = vmatprep.mubr.f32.mxu0 0.0
    %877 = vmatmul.mubr.f32.gmra.mrb[0].mxu0 %v810
    %v878 = vpop.f32.mrb[0].mxu0
    %v879 = vadd.f32 0.0, %v878
    %v880 = vpop.f32.mrb[0].mxu0
    %881 = vdwg.mxu0
    %v883 = vrot.slane %v879, 4
    %v885 = vadd.f32 %v171, %v883
    %v886 = vxor.u32 %v885, 2147483648
    %v887 = vmul.f32 %v886, 1.442695
    %v888 = vpow.pop %v887
    %v889 = vadd.f32 %v888, 1.0
    %v890 = vrcp.pop %v889
    %v891 = vmul.f32 1.0, %v890
    %v892 = vtanh.pop %v885
    %v894 = vrot.slane %v799, 6
    %v896 = vmul.f32 %v891, %v894
    %898 = vrot.lane.b32.xlu0 %v892, 64
    %v899 = vpop.permute.xlu0 %898
    %v901 = vmul.f32 %v891, %v899
    %903 = vrot.lane.b32.xlu0 %v901, 32
    %v904 = vpop.permute.xlu0 %903
    %v906 = vadd.f32 %v896, %v904
    %v907 = vtanh.pop %v906
    %909 = vrot.lane.b32.xlu0 %v907, 64
    %v910 = vpop.permute.xlu0 %909
    %v912 = vmul.f32 %v891, %v910
    %v914 = vrot.slane %v912, 4
    %915 = vrot.lane.b32.xlu0 %v914, 32
    %v916 = vpop.permute.xlu0 %915
    %v917 = vsel %vm92, %v916, 0
    %919 = vmatprep.subr.mxu0 0.0
    %920 = vmatpush1.msra.mxu0 %v174
    %921 = vmatprep.subr.mxu0 0.0
    %922 = vmatpush1.msra.mxu0 %v175
    %923 = vmatprep.subr.mxu0 0.0
    %924 = vmatpush1.msra.mxu0 %v176
    %925 = vmatprep.subr.mxu0 0.0
    %926 = vmatpush1.msra.mxu0 %v177
    %927 = vmatprep.subr.mxu0 0.0
    %928 = vmatpush1.msra.mxu0 0.0
    %929 = vmatprep.subr.mxu0 0.0
    %930 = vmatpush1.msra.mxu0 0.0
    %931 = vmatprep.subr.mxu0 0.0
    %932 = vmatpush1.msra.mxu0 0.0
    %933 = vmatprep.subr.mxu0 0.0
    %934 = vmatpush1.msra.mxu0 0.0
    %935 = vmatprep.subr.mxu0 0.0
    %936 = vmatpush1.msra.mxu0 0.0
    %937 = vmatprep.subr.mxu0 0.0
    %938 = vmatpush1.msra.mxu0 0.0
    %939 = vmatprep.subr.mxu0 0.0
    %940 = vmatpush1.msra.mxu0 0.0
    %941 = vmatprep.subr.mxu0 0.0
    %942 = vmatpush1.msra.mxu0 0.0
    %943 = vmatprep.subr.mxu0 0.0
    %944 = vmatpush1.msra.mxu0 0.0
    %945 = vmatprep.subr.mxu0 0.0
    %946 = vmatpush1.msra.mxu0 0.0
    %947 = vmatprep.subr.mxu0 0.0
    %948 = vmatpush1.msra.mxu0 0.0
    %949 = vmatprep.subr.mxu0 0.0
    %950 = vmatpush1.msra.mxu0 0.0
    %951 = vmatprep.subr.mxu0 0.0
    %952 = vmatpush1.msra.mxu0 0.0
    %953 = vmatprep.subr.mxu0 0.0
    %954 = vmatpush1.msra.mxu0 0.0
    %955 = vmatprep.subr.mxu0 0.0
    %956 = vmatpush1.msra.mxu0 0.0
    %957 = vmatprep.subr.mxu0 0.0
    %958 = vmatpush1.msra.mxu0 0.0
    %959 = vmatprep.subr.mxu0 0.0
    %960 = vmatpush1.msra.mxu0 0.0
    %961 = vmatprep.subr.mxu0 0.0
    %962 = vmatpush1.msra.mxu0 0.0
    %963 = vmatprep.subr.mxu0 0.0
    %964 = vmatpush1.msra.mxu0 0.0
    %965 = vmatprep.subr.mxu0 0.0
    %966 = vmatpush1.msra.mxu0 0.0
    %967 = vmatprep.subr.mxu0 0.0
    %968 = vmatpush1.msra.mxu0 0.0
    %969 = vmatprep.subr.mxu0 0.0
    %970 = vmatpush1.msra.mxu0 0.0
    %971 = vmatprep.subr.mxu0 0.0
    %972 = vmatpush1.msra.mxu0 0.0
    %973 = vmatprep.subr.mxu0 0.0
    %974 = vmatpush1.msra.mxu0 0.0
    %975 = vmatprep.subr.mxu0 0.0
    %976 = vmatpush1.msra.mxu0 0.0
    %977 = vmatprep.subr.mxu0 0.0
    %978 = vmatpush1.msra.mxu0 0.0
    %979 = vmatprep.subr.mxu0 0.0
    %980 = vmatpush1.msra.mxu0 0.0
    %981 = vmatprep.subr.mxu0 0.0
    %982 = vmatpush1.msra.mxu0 0.0
    %983 = vmatprep.mubr.f32.mxu0 0.0
    %984 = vmatmul.mubr.f32.gmra.mrb[0].mxu0 %v917
    %v985 = vpop.f32.mrb[0].mxu0
    %v986 = vadd.f32 0.0, %v985
    %v987 = vpop.f32.mrb[0].mxu0
    %988 = vdwg.mxu0
    %v990 = vrot.slane %v986, 2
    %v992 = vadd.f32 %v171, %v990
    %v993 = vxor.u32 %v992, 2147483648
    %v994 = vmul.f32 %v993, 1.442695
    %v995 = vpow.pop %v994
    %v996 = vadd.f32 %v995, 1.0
    %v997 = vrcp.pop %v996
    %v998 = vmul.f32 1.0, %v997
    %v999 = vtanh.pop %v992
    %v1001 = vrot.slane %v906, 6
    %v1003 = vmul.f32 %v998, %v1001
    %1005 = vrot.lane.b32.xlu0 %v999, 64
    %v1006 = vpop.permute.xlu0 %1005
    %v1008 = vmul.f32 %v998, %v1006
    %1010 = vrot.lane.b32.xlu0 %v1008, 32
    %v1011 = vpop.permute.xlu0 %1010
    %v1013 = vadd.f32 %v1003, %v1011
    %v1014 = vtanh.pop %v1013
    %1016 = vrot.lane.b32.xlu0 %v1014, 64
    %v1017 = vpop.permute.xlu0 %1016
    %v1019 = vmul.f32 %v998, %v1017
    %v1020 = vld [vmem:[#allocation8] sm:$0xff]
    %v1021 = vld [vmem:[#allocation8 + $0x8] sm:$0xff]
    %v1022 = vld [vmem:[#allocation8 + $0x10] sm:$0xff]
    %v1023 = vld [vmem:[#allocation8 + $0x18] sm:$0xff]
    %v1024 = vld [vmem:[%s5] sm:$0x1]
    %v1026 = vlaneseq
    %v1027 = vshrl.u32 %v1026, 7
    %v1028 = vsub.s32 0, %v1027
    %v1029 = vrot.slane %v1024, %v1028
    %v1032 = vrot.slane %v1019, 6
    %1033 = vrot.lane.b32.xlu0 %v1032, 32
    %v1034 = vpop.permute.xlu0 %1033
    %v1035 = vsel %vm92, %v1034, 0
    %1037 = vmatprep.subr.mxu0 0.0
    %1038 = vmatpush1.msra.mxu0 %v1020
    %1039 = vmatprep.subr.mxu0 0.0
    %1040 = vmatpush1.msra.mxu0 %v1021
    %1041 = vmatprep.subr.mxu0 0.0
    %1042 = vmatpush1.msra.mxu0 %v1022
    %1043 = vmatprep.subr.mxu0 0.0
    %1044 = vmatpush1.msra.mxu0 %v1023
    %1045 = vmatprep.subr.mxu0 0.0
    %1046 = vmatpush1.msra.mxu0 0.0
    %1047 = vmatprep.subr.mxu0 0.0
    %1048 = vmatpush1.msra.mxu0 0.0
    %1049 = vmatprep.subr.mxu0 0.0
    %1050 = vmatpush1.msra.mxu0 0.0
    %1051 = vmatprep.subr.mxu0 0.0
    %1052 = vmatpush1.msra.mxu0 0.0
    %1053 = vmatprep.subr.mxu0 0.0
    %1054 = vmatpush1.msra.mxu0 0.0
    %1055 = vmatprep.subr.mxu0 0.0
    %1056 = vmatpush1.msra.mxu0 0.0
    %1057 = vmatprep.subr.mxu0 0.0
    %1058 = vmatpush1.msra.mxu0 0.0
    %1059 = vmatprep.subr.mxu0 0.0
    %1060 = vmatpush1.msra.mxu0 0.0
    %1061 = vmatprep.subr.mxu0 0.0
    %1062 = vmatpush1.msra.mxu0 0.0
    %1063 = vmatprep.subr.mxu0 0.0
    %1064 = vmatpush1.msra.mxu0 0.0
    %1065 = vmatprep.subr.mxu0 0.0
    %1066 = vmatpush1.msra.mxu0 0.0
    %1067 = vmatprep.subr.mxu0 0.0
    %1068 = vmatpush1.msra.mxu0 0.0
    %1069 = vmatprep.subr.mxu0 0.0
    %1070 = vmatpush1.msra.mxu0 0.0
    %1071 = vmatprep.subr.mxu0 0.0
    %1072 = vmatpush1.msra.mxu0 0.0
    %1073 = vmatprep.subr.mxu0 0.0
    %1074 = vmatpush1.msra.mxu0 0.0
    %1075 = vmatprep.subr.mxu0 0.0
    %1076 = vmatpush1.msra.mxu0 0.0
    %1077 = vmatprep.subr.mxu0 0.0
    %1078 = vmatpush1.msra.mxu0 0.0
    %1079 = vmatprep.subr.mxu0 0.0
    %1080 = vmatpush1.msra.mxu0 0.0
    %1081 = vmatprep.subr.mxu0 0.0
    %1082 = vmatpush1.msra.mxu0 0.0
    %1083 = vmatprep.subr.mxu0 0.0
    %1084 = vmatpush1.msra.mxu0 0.0
    %1085 = vmatprep.subr.mxu0 0.0
    %1086 = vmatpush1.msra.mxu0 0.0
    %1087 = vmatprep.subr.mxu0 0.0
    %1088 = vmatpush1.msra.mxu0 0.0
    %1089 = vmatprep.subr.mxu0 0.0
    %1090 = vmatpush1.msra.mxu0 0.0
    %1091 = vmatprep.subr.mxu0 0.0
    %1092 = vmatpush1.msra.mxu0 0.0
    %1093 = vmatprep.subr.mxu0 0.0
    %1094 = vmatpush1.msra.mxu0 0.0
    %1095 = vmatprep.subr.mxu0 0.0
    %1096 = vmatpush1.msra.mxu0 0.0
    %1097 = vmatprep.subr.mxu0 0.0
    %1098 = vmatpush1.msra.mxu0 0.0
    %1099 = vmatprep.subr.mxu0 0.0
    %1100 = vmatpush1.msra.mxu0 0.0
    %1101 = vmatprep.mubr.f32.mxu0 0.0
    %1102 = vmatmul.mubr.f32.gmra.mrb[0].mxu0 %v1035
    %v1103 = vpop.f32.mrb[0].mxu0
    %v1104 = vadd.f32 %v1029, %v1103
    %v1105 = vpop.f32.mrb[0].mxu0
    %1106 = vdwg.mxu0
    %vm1107 = vcmask 254976
    %1108 = vst.msk [vmem:[#allocation10] sm:$0x3] %vm1107, %v1104
    // Predicated region
    $region42: #{tpu_custom_call.1} parent=1 // pred_check
      _
    $region43: #{tpu_custom_call.1} parent=1 // pred_check_branch
      %1110 = sbr.rel (0) target = $region45
    $region44: #{tpu_custom_call.1} parent=1 // pred_region
      %s1112 = ssub.s32 32, 32
      %1113 = vsyncadd [#allocation4], %s1112
      %s1115 = sshll.u32 [#allocation10], 4
      %s1116 = int_to_ptr.vmem [resolvable:$true] %s1115
      %1118 = dma.vmem_to_hbm [thread:$0]  %s1116, 32, %s6, [#allocation4]
    $region45: #{tpu_custom_call.1} parent=1 // pred_fallthru
      _
    // Predicated region
    $region46: #{tpu_custom_call.1} parent=1 // pred_check
      _
    $region47: #{tpu_custom_call.1} parent=1 // pred_check_branch
      %1120 = sbr.rel (0) target = $region49
    $region48: #{tpu_custom_call.1} parent=1 // pred_region
      %1121 = dma.done [#allocation4], 32
    $region49: #{tpu_custom_call.1} parent=1 // pred_fallthru
      _
    %1122 = vsyncpa [#allocation3], 1
    %1123 = vsyncpa [#allocation6], 1
    %1124 = vsyncpa [#allocation9], 1
    %1125 = vsyncpa [#allocation4], 1

</llo_original>
